<compile_context>
chip_gen: v5e
topology: v5e:2x2
jax: 0.10.0
libtpu: 0.0.40
codegen_flags: <defaults>
</compile_context>

<pallas_src>
import functools

import jax
import jax.numpy as jnp
import numpy as np
from jax import lax
from jax.experimental import pallas as pl
from jax.experimental.pallas import tpu as pltpu


def _round_up(n, m):
    return ((n + m - 1) // m) * m


def _pad_gate_cols(w, h, h_pad):
    """Pad each of the 4 gate blocks along the last (4*h) axis from h to h_pad."""
    if h == h_pad:
        return w
    lead = w.shape[:-1]
    w4 = w.reshape(lead + (4, h))
    w4 = jnp.pad(w4, [(0, 0)] * (len(lead) + 1) + [(0, h_pad - h)])
    return w4.reshape(lead + (4 * h_pad,))


# ---------------------------------------------------------------------------
# Pass 1: hoisted input projection  gx = x @ W_ih + b
# One large MXU-friendly bf16 matmul per (t_blk * Bp)-row block; grid is fully
# parallel (no recurrence here).
# ---------------------------------------------------------------------------
def _input_proj_kernel(x_ref, wih_ref, b_ref, gx_ref):
    x_bf = x_ref[...].astype(jnp.bfloat16)                         # (R, D)
    gx_ref[...] = (
        jnp.dot(x_bf, wih_ref[...], preferred_element_type=jnp.float32)
        + b_ref[...]                                               # (1, 4Hp) broadcast
    )


# ---------------------------------------------------------------------------
# Pass 2: recurrence.  Grid = (batch blocks ["parallel"], time blocks
# ["arbitrary"]).  h/c persist in VMEM scratch across the time axis; each grid
# step runs t_blk timesteps in a statically unrolled loop so the ~0.35us
# per-grid-step overhead is amortized.  Only h @ W_hh (bf16 operands, f32
# accumulation) plus 3 sigmoids + 2 tanh per step remain on the serial path.
# ---------------------------------------------------------------------------
def _lstm_recurrent_kernel(gx_ref, whh_ref, o_ref, h_ref, c_ref, *,
                           hidden, t_blk, rem):
    t_idx = pl.program_id(1)
    n_t = pl.num_programs(1)

    @pl.when(t_idx == 0)
    def _():
        h_ref[...] = jnp.zeros_like(h_ref)
        c_ref[...] = jnp.zeros_like(c_ref)

    whh = whh_ref[...]                                             # (Hp, 4Hp) bf16
    H = hidden

    for k in range(t_blk):                                         # static unroll
        h_prev = h_ref[...]
        c_prev = c_ref[...]
        gates = gx_ref[k] + jnp.dot(                               # (b_blk, 4Hp) f32
            h_prev.astype(jnp.bfloat16), whh,
            preferred_element_type=jnp.float32)
        # Hp is a multiple of 128 -> every gate slice is lane-aligned (free).
        i_g = jax.nn.sigmoid(gates[:, 0 * H:1 * H])
        f_g = jax.nn.sigmoid(gates[:, 1 * H:2 * H])
        g_g = jnp.tanh(gates[:, 2 * H:3 * H])
        o_g = jax.nn.sigmoid(gates[:, 3 * H:4 * H])
        c_new = f_g * c_prev + i_g * g_g
        h_new = o_g * jnp.tanh(c_new)
        if k >= rem:
            # This k only exists as time-padding in the final time block: skip.
            valid = t_idx < n_t - 1
            c_new = jnp.where(valid, c_new, c_prev)
            h_new = jnp.where(valid, h_new, h_prev)
        c_ref[...] = c_new
        h_ref[...] = h_new

    @pl.when(t_idx == n_t - 1)
    def _():
        o_ref[...] = h_ref[...].astype(o_ref.dtype)


def lstm_last_step(x, w_ih, w_hh, b, *, t_blk=8, b_blk=None):
    """x: [B, T, D] f32; w_ih: [D, 4H]; w_hh: [H, 4H]; b: [1, 4H] (= b_ih + b_hh).

    Returns [B, 1, H]  (== net(x)[:, -1, :].unsqueeze(1))."""
    B, T, D = x.shape
    H = w_hh.shape[0]
    assert w_ih.shape == (D, 4 * H) and b.shape == (1, 4 * H)

    # Hardware-friendly padding: per-gate hidden to lane multiple (128), batch
    # to sublane multiple (8), time to a multiple of the time block.
    Hp = _round_up(H, 128)
    Bp = _round_up(B, 8)
    n_t = int(pl.cdiv(T, t_blk))
    Tp = n_t * t_blk
    rem = T - (n_t - 1) * t_blk          # valid timesteps in the final time block
    if b_blk is None:
        b_blk = Bp                       # v7x: pass b_blk = Bp // 2 for 2 TCs
    assert Bp % b_blk == 0
    n_b = Bp // b_blk

    # Weights: pad each gate block to Hp; matmul operands in bf16.
    w_ih_p = _pad_gate_cols(w_ih, H, Hp).astype(jnp.bfloat16)              # (D, 4Hp)
    w_hh_p = _pad_gate_cols(w_hh, H, Hp)
    w_hh_p = jnp.pad(w_hh_p, ((0, Hp - H), (0, 0))).astype(jnp.bfloat16)   # (Hp, 4Hp)
    b_p = _pad_gate_cols(b.astype(jnp.float32), H, Hp)                     # (1, 4Hp)

    # x -> time-major rows [Tp*Bp, D] (wrapper-side XLA glue) so the recurrent
    # kernel reads a clean (b_blk, 4Hp) slab per step.
    x_tbd = jnp.transpose(x, (1, 0, 2))
    x_tbd = jnp.pad(x_tbd, ((0, Tp - T), (0, Bp - B), (0, 0)))
    x_2d = x_tbd.reshape(Tp * Bp, D)

    vmem_limit = 32 * 1024 * 1024

    # ---- pass 1: input projection (parallel) --------------------------------
    r_blk = t_blk * Bp
    gx_2d = pl.pallas_call(
        _input_proj_kernel,
        out_shape=jax.ShapeDtypeStruct((Tp * Bp, 4 * Hp), jnp.float32),
        grid_spec=pltpu.PrefetchScalarGridSpec(
            num_scalar_prefetch=0,
            grid=(n_t,),
            in_specs=[
                pl.BlockSpec((r_blk, D), lambda i: (i, 0)),       # x rows
                pl.BlockSpec((D, 4 * Hp), lambda i: (0, 0)),      # W_ih (bf16)
                pl.BlockSpec((1, 4 * Hp), lambda i: (0, 0)),      # bias
            ],
            out_specs=pl.BlockSpec((r_blk, 4 * Hp), lambda i: (i, 0)),
        ),
        compiler_params=pltpu.CompilerParams(
            dimension_semantics=("parallel",),
            vmem_limit_bytes=vmem_limit,
        ),
    )(x_2d, w_ih_p, b_p)
    gx = gx_2d.reshape(Tp, Bp, 4 * Hp)   # free reshape (leading dims only)

    # ---- pass 2: recurrence --------------------------------------------------
    kernel = functools.partial(_lstm_recurrent_kernel,
                               hidden=Hp, t_blk=t_blk, rem=rem)
    h_last = pl.pallas_call(
        kernel,
        out_shape=jax.ShapeDtypeStruct((Bp, Hp), jnp.float32),
        grid_spec=pltpu.PrefetchScalarGridSpec(
            num_scalar_prefetch=0,
            grid=(n_b, n_t),
            in_specs=[
                pl.BlockSpec((t_blk, b_blk, 4 * Hp),
                             lambda bi, ti: (ti, bi, 0)),         # gx block
                pl.BlockSpec((Hp, 4 * Hp), lambda bi, ti: (0, 0)),  # W_hh (bf16)
            ],
            out_specs=pl.BlockSpec((b_blk, Hp), lambda bi, ti: (bi, 0)),
            scratch_shapes=[
                pltpu.VMEM((b_blk, Hp), jnp.float32),             # h
                pltpu.VMEM((b_blk, Hp), jnp.float32),             # c
            ],
        ),
        compiler_params=pltpu.CompilerParams(
            dimension_semantics=("parallel", "arbitrary"),
            vmem_limit_bytes=vmem_limit,
        ),
    )(gx, w_hh_p)

    return h_last[:B, None, :H]          # [B, 1, H]


def _reference_lstm_last(x, w_ih, w_hh, b):
    """Pure-JAX f32 reference (lax.scan over time)."""
    B, T, D = x.shape
    H = w_hh.shape[0]

    def step(carry, x_t):
        h, c = carry
        gates = x_t @ w_ih + h @ w_hh + b
        i_g = jax.nn.sigmoid(gates[:, 0 * H:1 * H])
        f_g = jax.nn.sigmoid(gates[:, 1 * H:2 * H])
        g_g = jnp.tanh(gates[:, 2 * H:3 * H])
        o_g = jax.nn.sigmoid(gates[:, 3 * H:4 * H])
        c = f_g * c + i_g * g_g
        h = o_g * jnp.tanh(c)
        return (h, c), None

    h0 = jnp.zeros((B, H), jnp.float32)
    c0 = jnp.zeros((B, H), jnp.float32)
    (h, _), _ = lax.scan(step, (h0, c0), jnp.transpose(x, (1, 0, 2)))
    return h[:, None, :]


if __name__ == "__main__":
    B, T, D, H = 2, 8, 16, 32

    key = jax.random.PRNGKey(0)
    kx, kih, khh, kbi, kbh = jax.random.split(key, 5)

    x = jax.random.normal(kx, (B, T, D), dtype=jnp.float32)

    # Deterministic PyTorch-style LSTM init: U(-1/sqrt(H), 1/sqrt(H)).
    s = 1.0 / float(np.sqrt(H))
    w_ih = jax.random.uniform(kih, (D, 4 * H), minval=-s, maxval=s, dtype=jnp.float32)
    w_hh = jax.random.uniform(khh, (H, 4 * H), minval=-s, maxval=s, dtype=jnp.float32)
    b_ih = jax.random.uniform(kbi, (1, 4 * H), minval=-s, maxval=s, dtype=jnp.float32)
    b_hh = jax.random.uniform(kbh, (1, 4 * H), minval=-s, maxval=s, dtype=jnp.float32)
    b = b_ih + b_hh

    out = jax.block_until_ready(lstm_last_step(x, w_ih, w_hh, b))
    assert out.shape == (B, 1, H), out.shape

    ref = jax.block_until_ready(_reference_lstm_last(x, w_ih, w_hh, b))
    # bf16 matmul operands -> slightly looser tolerance than pure f32.
    np.testing.assert_allclose(np.asarray(out), np.asarray(ref), rtol=5e-2, atol=5e-3)

    print("KERNEL_OK")
</pallas_src>

<mosaic_0001>
module attributes {stable_mosaic.version = 11 : i64} {
  func.func @_input_proj_kernel(%arg0: i32, %arg1: memref<64x16xf32, #tpu.memory_space<vmem>>, %arg2: memref<16x512xbf16, #tpu.memory_space<vmem>>, %arg3: memref<1x512xf32, #tpu.memory_space<vmem>>, %arg4: memref<64x512xf32, #tpu.memory_space<vmem>>) attributes {dimension_semantics = [#tpu.dimension_semantics<parallel>], iteration_bounds = array<i64: 1>, scalar_prefetch = 0 : i64, scratch_operands = 0 : i64, tpu.core_type = #tpu.core_type<tc>, window_params = [{transform_indices = @transform_0, window_bounds = array<i64: 64, 16>}, {pipeline_mode = #tpu.pipeline_mode<synchronous>, transform_indices = @transform_1, window_bounds = array<i64: 16, 512>}, {pipeline_mode = #tpu.pipeline_mode<synchronous>, transform_indices = @transform_2, window_bounds = array<i64: 1, 512>}, {transform_indices = @transform_3, window_bounds = array<i64: 64, 512>}]} {
    %c0 = arith.constant 0 : index
    %c0_0 = arith.constant 0 : index
    %0 = vector.load %arg1[%c0, %c0_0] : memref<64x16xf32, #tpu.memory_space<vmem>>, vector<64x16xf32>
    %1 = arith.truncf %0 : vector<64x16xf32> to vector<64x16xbf16>
    %c0_1 = arith.constant 0 : index
    %c0_2 = arith.constant 0 : index
    %2 = vector.load %arg2[%c0_1, %c0_2] : memref<16x512xbf16, #tpu.memory_space<vmem>>, vector<16x512xbf16>
    %cst = arith.constant dense<0.000000e+00> : vector<64x512xf32>
    %3 = tpu.matmul %1, %2, %cst {dimension_numbers = #tpu.dot_dimension_numbers<[1], [0], [0], [1], [0, 0, 1, 1], [], []>} : vector<64x16xbf16>, vector<16x512xbf16>, vector<64x512xf32> -> vector<64x512xf32>
    %c0_3 = arith.constant 0 : index
    %c0_4 = arith.constant 0 : index
    %4 = vector.load %arg3[%c0_3, %c0_4] : memref<1x512xf32, #tpu.memory_space<vmem>>, vector<1x512xf32>
    %5 = vector.broadcast %4 : vector<1x512xf32> to vector<64x512xf32>
    %6 = arith.addf %3, %5 : vector<64x512xf32>
    %c0_5 = arith.constant 0 : index
    %c0_6 = arith.constant 0 : index
    %7 = vector.load %arg4[%c0_5, %c0_6] : memref<64x512xf32, #tpu.memory_space<vmem>>, vector<64x512xf32>
    tpu.vector_store %arg4[%c0_5, %c0_6], %6 {strides = array<i32>} : memref<64x512xf32, #tpu.memory_space<vmem>>, vector<64x512xf32>,
    return
  }
  func.func @transform_0(%arg0: i32) -> (i32, i32) {
    %c0_i32 = arith.constant 0 : i32
    %c0_i32_0 = arith.constant 0 : i32
    return %arg0, %c0_i32 : i32, i32
  }
  func.func @transform_1(%arg0: i32) -> (i32, i32) {
    %c0_i32 = arith.constant 0 : i32
    %c0_i32_0 = arith.constant 0 : i32
    %c0_i32_1 = arith.constant 0 : i32
    return %c0_i32, %c0_i32_0 : i32, i32
  }
  func.func @transform_2(%arg0: i32) -> (i32, i32) {
    %c0_i32 = arith.constant 0 : i32
    %c0_i32_0 = arith.constant 0 : i32
    %c0_i32_1 = arith.constant 0 : i32
    return %c0_i32, %c0_i32_0 : i32, i32
  }
  func.func @transform_3(%arg0: i32) -> (i32, i32) {
    %c0_i32 = arith.constant 0 : i32
    %c0_i32_0 = arith.constant 0 : i32
    return %arg0, %c0_i32 : i32, i32
  }
}

</mosaic_0001>

<llo_original>
// kernel: tpu_custom_call.1
$region0: #{tpu_custom_call.1}
  #allocation0 [shape = 'u32[]', space=smem, size = 0x4, offset = 0x4, fixed_abs, tag = 'smem constant byte address 0x4 - core index']
  #allocation1 [shape = 'u32[72,128]{1,0:T(1,128)}', space=vmem, size = 0x9000, scoped, tag = 'internal scratch']
  %s0 = inlined_call_operand.vmem [shape: f32[64,16], index: 0, kind: input, shape index: {}]
  %s1 = inlined_call_operand.vmem [shape: bf16[16,512], index: 1, kind: input, shape index: {}]
  %s2 = inlined_call_operand.vmem [shape: f32[1,512], index: 2, kind: input, shape index: {}]
  %s3 = inlined_call_operand.hbm [shape: f32[64,512], index: 3, kind: output, shape index: {}]
  %s4 = sld [smem:[#allocation0]]
  $region22: #{tpu_custom_call.1} parent=0
    _
  %s6 = ssub.s32 1, %s4
  %s7 = scalar_select 0, %s6, %s4
  $region1: #{tpu_custom_call.1} parent=0
    #allocation2 [shape = 'u8[131072]{0}', space=vmem, size = 0x20000, scoped, tag = 'output window, operand 0, single buffered']
    #allocation3 [shape = 's32[1]{0}', space=sflag, size = 0x4, scoped, tag = 'scoped memory for tpu_custom_call.1']
    %8 = vsyncpa [#allocation3], 0
    // Predicated region
    $region2: #{tpu_custom_call.1} parent=1 // pred_check
      _
    $region3: #{tpu_custom_call.1} parent=1 // pred_check_branch
      %10 = sbr.rel (0) target = $region5
    $region4: #{tpu_custom_call.1} parent=1 // pred_region
      _
    $region5: #{tpu_custom_call.1} parent=1 // pred_fallthru
      _
    // Predicated region
    $region6: #{tpu_custom_call.1} parent=1 // pred_check
      _
    $region7: #{tpu_custom_call.1} parent=1 // pred_check_branch
      %12 = sbr.rel (0) target = $region9
    $region8: #{tpu_custom_call.1} parent=1 // pred_region
      _
    $region9: #{tpu_custom_call.1} parent=1 // pred_fallthru
      _
    // Predicated region
    $region10: #{tpu_custom_call.1} parent=1 // pred_check
      _
    $region11: #{tpu_custom_call.1} parent=1 // pred_check_branch
      %14 = sbr.rel (0) target = $region13
    $region12: #{tpu_custom_call.1} parent=1 // pred_region
      _
    $region13: #{tpu_custom_call.1} parent=1 // pred_fallthru
      _
    %v16 = vld [vmem:[%s0] sm:$0xff]
    %v17 = vld [vmem:[%s0 + $0x8] sm:$0xff]
    %v18 = vld [vmem:[%s0 + $0x10] sm:$0xff]
    %v19 = vld [vmem:[%s0 + $0x18] sm:$0xff]
    %v20 = vld [vmem:[%s0 + $0x20] sm:$0xff]
    %v21 = vld [vmem:[%s0 + $0x28] sm:$0xff]
    %v22 = vld [vmem:[%s0 + $0x30] sm:$0xff]
    %v23 = vld [vmem:[%s0 + $0x38] sm:$0xff]
    %v24 = vpack.c.bf16 %v17, %v16
    %v25 = vpack.c.bf16 %v19, %v18
    %v26 = vpack.c.bf16 %v21, %v20
    %v27 = vpack.c.bf16 %v23, %v22
    %v28 = vld [vmem:[%s1] sm:$0xff]
    %v29 = vld [vmem:[%s1 + $0x8] sm:$0xff]
    %v30 = vld [vmem:[%s1 + $0x10] sm:$0xff]
    %v31 = vld [vmem:[%s1 + $0x18] sm:$0xff]
    %v32 = vld [vmem:[%s2] sm:$0xf]
    %v34 = vperm.slane %v32, 0
    %v35 = vperm.slane %v32, 1
    %v36 = vperm.slane %v32, 2
    %v37 = vperm.slane %v32, 3
    %v46 = vunpack.c.l.b16 %v28
    %v47 = vunpack.c.h.b16 %v28
    %v48 = vunpack.c.l.b16 %v29
    %v49 = vunpack.c.h.b16 %v29
    %v50 = vunpack.c.l.b16 %v30
    %v51 = vunpack.c.h.b16 %v30
    %v52 = vunpack.c.l.b16 %v31
    %v53 = vunpack.c.h.b16 %v31
    %v54 = vpack.c.b16 %v50, %v46
    %v55 = vpack.c.b16 %v51, %v47
    %v56 = vpack.c.b16 %v52, %v48
    %v57 = vpack.c.b16 %v53, %v49
    %vm62 = vcmask 130048
    %v64 = vsel %vm62, %v24, 0
    %v67 = vsel %vm62, %v25, 0
    %v70 = vsel %vm62, %v26, 0
    %v73 = vsel %vm62, %v27, 0
    %75 = vmatpush.bf16.msra.mxu0 0
    %76 = vmatpush.bf16.msra.mxu0 0
    %77 = vmatpush.bf16.msra.mxu0 0
    %78 = vmatpush.bf16.msra.mxu0 0
    %79 = vmatpush.bf16.msra.mxu0 0
    %80 = vmatpush.bf16.msra.mxu0 0
    %81 = vmatpush.bf16.msra.mxu0 0
    %82 = vmatpush.bf16.msra.mxu0 %v54
    %83 = vmatmul.bf16.gmra.mxu0 %v64
    %v84 = vpop.f32.mrf.mxu0
    %v85 = vadd.f32 %v34, %v84
    %v86 = vpop.f32.mrf.mxu0
    %v87 = vadd.f32 %v34, %v86
    %88 = vmatmul.bf16.gmra.mxu0 %v67
    %v89 = vpop.f32.mrf.mxu0
    %v90 = vadd.f32 %v34, %v89
    %v91 = vpop.f32.mrf.mxu0
    %v92 = vadd.f32 %v34, %v91
    %93 = vmatmul.bf16.gmra.mxu0 %v70
    %v94 = vpop.f32.mrf.mxu0
    %v95 = vadd.f32 %v34, %v94
    %v96 = vpop.f32.mrf.mxu0
    %v97 = vadd.f32 %v34, %v96
    %98 = vmatmul.bf16.gmra.mxu0 %v73
    %v99 = vpop.f32.mrf.mxu0
    %v100 = vadd.f32 %v34, %v99
    %v101 = vpop.f32.mrf.mxu0
    %v102 = vadd.f32 %v34, %v101
    %103 = vdwg.mxu0
    %104 = vmatpush.bf16.msra.mxu0 0
    %105 = vmatpush.bf16.msra.mxu0 0
    %106 = vmatpush.bf16.msra.mxu0 0
    %107 = vmatpush.bf16.msra.mxu0 0
    %108 = vmatpush.bf16.msra.mxu0 0
    %109 = vmatpush.bf16.msra.mxu0 0
    %110 = vmatpush.bf16.msra.mxu0 0
    %111 = vmatpush.bf16.msra.mxu0 %v55
    %112 = vmatmul.bf16.gmra.mxu0 %v64
    %v113 = vpop.f32.mrf.mxu0
    %v114 = vadd.f32 %v35, %v113
    %v115 = vpop.f32.mrf.mxu0
    %v116 = vadd.f32 %v35, %v115
    %117 = vmatmul.bf16.gmra.mxu0 %v67
    %v118 = vpop.f32.mrf.mxu0
    %v119 = vadd.f32 %v35, %v118
    %v120 = vpop.f32.mrf.mxu0
    %v121 = vadd.f32 %v35, %v120
    %122 = vmatmul.bf16.gmra.mxu0 %v70
    %v123 = vpop.f32.mrf.mxu0
    %v124 = vadd.f32 %v35, %v123
    %v125 = vpop.f32.mrf.mxu0
    %v126 = vadd.f32 %v35, %v125
    %127 = vmatmul.bf16.gmra.mxu0 %v73
    %v128 = vpop.f32.mrf.mxu0
    %v129 = vadd.f32 %v35, %v128
    %v130 = vpop.f32.mrf.mxu0
    %v131 = vadd.f32 %v35, %v130
    %132 = vdwg.mxu0
    %133 = vmatpush.bf16.msra.mxu0 0
    %134 = vmatpush.bf16.msra.mxu0 0
    %135 = vmatpush.bf16.msra.mxu0 0
    %136 = vmatpush.bf16.msra.mxu0 0
    %137 = vmatpush.bf16.msra.mxu0 0
    %138 = vmatpush.bf16.msra.mxu0 0
    %139 = vmatpush.bf16.msra.mxu0 0
    %140 = vmatpush.bf16.msra.mxu0 %v56
    %141 = vmatmul.bf16.gmra.mxu0 %v64
    %v142 = vpop.f32.mrf.mxu0
    %v143 = vadd.f32 %v36, %v142
    %v144 = vpop.f32.mrf.mxu0
    %v145 = vadd.f32 %v36, %v144
    %146 = vmatmul.bf16.gmra.mxu0 %v67
    %v147 = vpop.f32.mrf.mxu0
    %v148 = vadd.f32 %v36, %v147
    %v149 = vpop.f32.mrf.mxu0
    %v150 = vadd.f32 %v36, %v149
    %151 = vmatmul.bf16.gmra.mxu0 %v70
    %v152 = vpop.f32.mrf.mxu0
    %v153 = vadd.f32 %v36, %v152
    %v154 = vpop.f32.mrf.mxu0
    %v155 = vadd.f32 %v36, %v154
    %156 = vmatmul.bf16.gmra.mxu0 %v73
    %v157 = vpop.f32.mrf.mxu0
    %v158 = vadd.f32 %v36, %v157
    %v159 = vpop.f32.mrf.mxu0
    %v160 = vadd.f32 %v36, %v159
    %161 = vdwg.mxu0
    %162 = vmatpush.bf16.msra.mxu0 0
    %163 = vmatpush.bf16.msra.mxu0 0
    %164 = vmatpush.bf16.msra.mxu0 0
    %165 = vmatpush.bf16.msra.mxu0 0
    %166 = vmatpush.bf16.msra.mxu0 0
    %167 = vmatpush.bf16.msra.mxu0 0
    %168 = vmatpush.bf16.msra.mxu0 0
    %169 = vmatpush.bf16.msra.mxu0 %v57
    %170 = vmatmul.bf16.gmra.mxu0 %v64
    %v171 = vpop.f32.mrf.mxu0
    %v172 = vadd.f32 %v37, %v171
    %v173 = vpop.f32.mrf.mxu0
    %v174 = vadd.f32 %v37, %v173
    %175 = vmatmul.bf16.gmra.mxu0 %v67
    %v176 = vpop.f32.mrf.mxu0
    %v177 = vadd.f32 %v37, %v176
    %v178 = vpop.f32.mrf.mxu0
    %v179 = vadd.f32 %v37, %v178
    %180 = vmatmul.bf16.gmra.mxu0 %v70
    %v181 = vpop.f32.mrf.mxu0
    %v182 = vadd.f32 %v37, %v181
    %v183 = vpop.f32.mrf.mxu0
    %v184 = vadd.f32 %v37, %v183
    %185 = vmatmul.bf16.gmra.mxu0 %v73
    %v186 = vpop.f32.mrf.mxu0
    %v187 = vadd.f32 %v37, %v186
    %v188 = vpop.f32.mrf.mxu0
    %v189 = vadd.f32 %v37, %v188
    %190 = vdwg.mxu0
    %191 = vst [vmem:[#allocation2] sm:$0xff] %v85
    %192 = vst [vmem:[#allocation2 + $0x8] sm:$0xff] %v114
    %193 = vst [vmem:[#allocation2 + $0x10] sm:$0xff] %v143
    %194 = vst [vmem:[#allocation2 + $0x18] sm:$0xff] %v172
    %195 = vst [vmem:[#allocation2 + $0x20] sm:$0xff] %v87
    %196 = vst [vmem:[#allocation2 + $0x28] sm:$0xff] %v116
    %197 = vst [vmem:[#allocation2 + $0x30] sm:$0xff] %v145
    %198 = vst [vmem:[#allocation2 + $0x38] sm:$0xff] %v174
    %199 = vst [vmem:[#allocation2 + $0x40] sm:$0xff] %v90
    %200 = vst [vmem:[#allocation2 + $0x48] sm:$0xff] %v119
    %201 = vst [vmem:[#allocation2 + $0x50] sm:$0xff] %v148
    %202 = vst [vmem:[#allocation2 + $0x58] sm:$0xff] %v177
    %203 = vst [vmem:[#allocation2 + $0x60] sm:$0xff] %v92
    %204 = vst [vmem:[#allocation2 + $0x68] sm:$0xff] %v121
    %205 = vst [vmem:[#allocation2 + $0x70] sm:$0xff] %v150
    %206 = vst [vmem:[#allocation2 + $0x78] sm:$0xff] %v179
    %207 = vst [vmem:[#allocation2 + $0x80] sm:$0xff] %v95
    %208 = vst [vmem:[#allocation2 + $0x88] sm:$0xff] %v124
    %209 = vst [vmem:[#allocation2 + $0x90] sm:$0xff] %v153
    %210 = vst [vmem:[#allocation2 + $0x98] sm:$0xff] %v182
    %211 = vst [vmem:[#allocation2 + $0xa0] sm:$0xff] %v97
    %212 = vst [vmem:[#allocation2 + $0xa8] sm:$0xff] %v126
    %213 = vst [vmem:[#allocation2 + $0xb0] sm:$0xff] %v155
    %214 = vst [vmem:[#allocation2 + $0xb8] sm:$0xff] %v184
    %215 = vst [vmem:[#allocation2 + $0xc0] sm:$0xff] %v100
    %216 = vst [vmem:[#allocation2 + $0xc8] sm:$0xff] %v129
    %217 = vst [vmem:[#allocation2 + $0xd0] sm:$0xff] %v158
    %218 = vst [vmem:[#allocation2 + $0xd8] sm:$0xff] %v187
    %219 = vst [vmem:[#allocation2 + $0xe0] sm:$0xff] %v102
    %220 = vst [vmem:[#allocation2 + $0xe8] sm:$0xff] %v131
    %221 = vst [vmem:[#allocation2 + $0xf0] sm:$0xff] %v160
    %222 = vst [vmem:[#allocation2 + $0xf8] sm:$0xff] %v189
    // Predicated region
    $region14: #{tpu_custom_call.1} parent=1 // pred_check
      _
    $region15: #{tpu_custom_call.1} parent=1 // pred_check_branch
      %224 = sbr.rel (0) target = $region17
    $region16: #{tpu_custom_call.1} parent=1 // pred_region
      %226 = vsyncadd [#allocation3], 0
      %s227 = sshll.u32 [#allocation2], 4
      %s228 = int_to_ptr.vmem [resolvable:$true] %s227
      %s229 = sshll.u32 %s3, 4
      %s230 = int_to_ptr.hbm [resolvable:$true] %s229
      %235 = dma.vmem_to_hbm [thread:$0]  %s228, 4096, %s230, [#allocation3], 512, 512, 32
    $region17: #{tpu_custom_call.1} parent=1 // pred_fallthru
      _
    // Predicated region
    $region18: #{tpu_custom_call.1} parent=1 // pred_check
      _
    $region19: #{tpu_custom_call.1} parent=1 // pred_check_branch
      %237 = sbr.rel (0) target = $region21
    $region20: #{tpu_custom_call.1} parent=1 // pred_region
      %239 = dma.done [#allocation3], 4096
    $region21: #{tpu_custom_call.1} parent=1 // pred_fallthru
      _
    %240 = vsyncpa [#allocation3], 1

</llo_original>
